<compile_context>
chip_gen: v6e
topology: v6e:2x2x1
jax: 0.10.0
libtpu: 0.0.40
codegen_flags: <defaults>
</compile_context>

<pallas_src>
import jax
import jax.numpy as jnp
from jax import lax
from jax.experimental import pallas as pl
from jax.experimental.pallas import tpu as pltpu


_EPS = 1e-5
_MIB = 1024 * 1024


# --------------------------------------------------------------------------
# Kernel body (shared by all tiling paths; relies on numpy broadcasting).
#   path A/C: x block (ct, st),       scale/shift block (ct, 1)
#   path B  : x block (bn, rt, g),    scale/shift block (rt, g)
# --------------------------------------------------------------------------
def _frozen_bn_kernel(x_ref, scale_ref, shift_ref, o_ref):
    x = x_ref[...].astype(jnp.float32)
    y = x * scale_ref[...] + shift_ref[...]
    o_ref[...] = y.astype(o_ref.dtype)


# --------------------------------------------------------------------------
# Tiling helpers
# --------------------------------------------------------------------------
def _largest_aligned_divisor(total, unit, cap):
    """Largest divisor of `total` that is a multiple of `unit` and <= cap."""
    if total <= 0 or unit <= 0 or total % unit != 0 or cap < unit:
        return None
    m = total // unit
    best = None
    i = 1
    while i * i <= m:
        if m % i == 0:
            for d in (i, m // i):
                cand = unit * d
                if cand <= cap and (best is None or cand > best):
                    best = cand
        i += 1
    return best


def _vmem_capacity_bytes():
    try:
        cap = int(pltpu.get_tpu_info().vmem_capacity_bytes)
        if cap >= 8 * _MIB:
            return cap
    except Exception:
        pass
    return 64 * _MIB  # conservative (v7x physical VMEM)


def _plan_chw(C, HW, itemsize, target_bytes):
    """Blocks for the (N, C, HW) layout: (ct channels) x (st spatial lanes)."""
    target_elems = max(target_bytes // max(itemsize, 1), 8 * 128)
    sublane = max(8, 32 // max(itemsize, 1))      # 8 f32, 16 bf16, 32 int8
    st = _largest_aligned_divisor(HW, 128, max(128, target_elems // sublane))
    lane_aligned = st is not None
    if st is None:
        st = HW                                   # full extent is always legal
    ct = _largest_aligned_divisor(C, sublane, max(1, target_elems // st))
    if ct is None:
        ct = _largest_aligned_divisor(C, 8, max(1, target_elems // st))
    if ct is None:
        ct = C                                    # full extent is always legal
    return ct, st, lane_aligned


def _plan_flat(N, C, HW, itemsize, target_bytes, vmem_cap):
    """Lane-dense plan for unaligned HW: view x as (N, R, g) with 128 | g."""
    L = C * HW
    if L % 128 != 0:
        return None
    # Per-element params double the VMEM/traffic share -> halve the budget.
    target_bytes = max(_MIB, target_bytes // 2)
    target_elems = max(target_bytes // max(itemsize, 1), 8 * 128)
    g = (_largest_aligned_divisor(L, 128, min(max(L // 8, 128), 4096))
         or _largest_aligned_divisor(L, 128, max(L // 8, 128))
         or _largest_aligned_divisor(L, 128, L))
    if g is None:
        return None
    R = L // g
    if L <= target_elems:                         # whole image(s) per block
        rt = R
        bn = _largest_aligned_divisor(N, 1, max(1, target_elems // L)) or 1
    else:                                         # row-tile a single image
        bn = 1
        rt = _largest_aligned_divisor(R, 8, max(8, target_elems // g))
        if rt is None:
            relaxed_elems = max(target_elems, (vmem_cap // 8) // max(itemsize, 1))
            if L <= relaxed_elems:
                rt = R
            else:
                return None                       # fall back to the CHW path
    return g, R, rt, bn


# --------------------------------------------------------------------------
# Forward
# --------------------------------------------------------------------------
def _xla_forward(x, scale, shift):
    C = scale.shape[0]
    y = (x.astype(jnp.float32) * scale.reshape(1, C, 1, 1)
         + shift.reshape(1, C, 1, 1))
    return y.astype(x.dtype)


def frozen_batch_norm_2d(x, weight, bias, running_mean, running_var, *,
                         use_pallas=None, target_block_bytes=None,
                         donate_x=False):
    """FrozenBatchNorm2d forward.  x: (N, C, H, W); params: (C,)."""
    N, C, H, W = x.shape
    HW = H * W
    itemsize = jnp.dtype(x.dtype).itemsize

    # Per-channel frozen affine, computed once, in float32 (f32 buffers).
    w32 = weight.astype(jnp.float32)
    b32 = bias.astype(jnp.float32)
    rm32 = running_mean.astype(jnp.float32)
    rv32 = running_var.astype(jnp.float32)
    scale = w32 * lax.rsqrt(rv32 + _EPS)          # (C,)
    shift = b32 - rm32 * scale                    # (C,)

    # Tiny tensors: the pallas_call fixed cost dominates; let XLA fuse it.
    if use_pallas is None:
        use_pallas = x.size * itemsize >= _MIB
    if not use_pallas:
        return _xla_forward(x, scale, shift)

    vmem_cap = _vmem_capacity_bytes()
    if target_block_bytes is None:
        target_block_bytes = min(8 * _MIB, max(2 * _MIB, vmem_cap // 12))

    ct, st, lane_aligned = _plan_chw(C, HW, itemsize, target_block_bytes)
    flat_plan = None
    if not lane_aligned:
        flat_plan = _plan_flat(N, C, HW, itemsize, target_block_bytes, vmem_cap)

    if flat_plan is not None:
        # ---- Path B: lane-dense flattened view (N, R, g), 128 | g ----------
        g_, R, rt, bn = flat_plan
        x_in = x.reshape(N, R, g_)
        scale_in = jnp.repeat(scale, HW).reshape(R, g_)
        shift_in = jnp.repeat(shift, HW).reshape(R, g_)
        grid = (R // rt, N // bn)                 # batch innermost -> params
        x_map = lambda r, b: (b, r, 0)            # stay resident across N
        p_map = lambda r, b: (r, 0)
        x_spec = pl.BlockSpec((bn, rt, g_), x_map)
        p_spec = pl.BlockSpec((rt, g_), p_map)
        out_spec = pl.BlockSpec((bn, rt, g_), x_map)
        out_shape = jax.ShapeDtypeStruct((N, R, g_), x.dtype)
        block_elems = bn * rt * g_
        param_block_elems = rt * g_
        param_bytes = 2 * R * g_ * 4
    else:
        # ---- Path A (aligned HW) / C (fallback): (N, C, HW) ----------------
        x_in = x.reshape(N, C, HW)
        scale_in = scale.reshape(C, 1)
        shift_in = shift.reshape(C, 1)
        cb = C // ct
        grid = (N * cb, HW // st)                 # folded batch*channel axis
        if cb == 1:
            x_map = lambda gi, j: (gi, 0, j)
            p_map = lambda gi, j: (0, 0)
        else:
            x_map = lambda gi, j: (gi // cb, gi % cb, j)
            p_map = lambda gi, j: (gi % cb, 0)
        x_spec = pl.BlockSpec((None, ct, st), x_map)
        p_spec = pl.BlockSpec((ct, 1), p_map)
        out_spec = pl.BlockSpec((None, ct, st), x_map)
        out_shape = jax.ShapeDtypeStruct((N, C, HW), x.dtype)
        block_elems = ct * st
        param_block_elems = ct
        param_bytes = 2 * C * 4

    # VMEM budget: in+out blocks double-buffered, param blocks, f32 temps.
    block_bytes = block_elems * itemsize
    vmem_limit = (4 * block_bytes + 4 * param_block_elems * 4
                  + 2 * block_elems * 4 + 2 * _MIB)
    vmem_limit = min(int(vmem_cap * 0.9), max(32 * _MIB, vmem_limit))

    cost = pl.CostEstimate(
        flops=2 * x.size, transcendentals=0,
        bytes_accessed=2 * x.size * itemsize + param_bytes)

    out = pl.pallas_call(
        _frozen_bn_kernel,
        out_shape=out_shape,
        grid=grid,
        in_specs=[x_spec, p_spec, p_spec],
        out_specs=out_spec,
        compiler_params=pltpu.CompilerParams(
            dimension_semantics=("parallel",) * len(grid),
            vmem_limit_bytes=int(vmem_limit)),
        cost_estimate=cost,
        input_output_aliases=({0: 0} if donate_x else {}),
    )(x_in, scale_in, shift_in)

    return out.reshape(N, C, H, W)


# --------------------------------------------------------------------------
# Reference + tests
# --------------------------------------------------------------------------
def _reference(x, weight, bias, running_mean, running_var):
    eps = 1e-5
    C = weight.shape[0]
    w = weight.reshape(1, C, 1, 1).astype(jnp.float32)
    b = bias.reshape(1, C, 1, 1).astype(jnp.float32)
    rv = running_var.reshape(1, C, 1, 1).astype(jnp.float32)
    rm = running_mean.reshape(1, C, 1, 1).astype(jnp.float32)
    scale = w * jax.lax.rsqrt(rv + eps)
    y = x.astype(jnp.float32) * scale + (b - rm * scale)
    return y.astype(x.dtype)


def _make_params(key, C):
    kw, kb, km, kv = jax.random.split(key, 4)
    weight = jnp.ones((C,), jnp.float32) + 0.1 * jax.random.normal(kw, (C,))
    bias = 0.1 * jax.random.normal(kb, (C,))
    running_mean = 0.2 * jax.random.normal(km, (C,))
    running_var = jnp.ones((C,), jnp.float32) + 0.1 * jnp.abs(
        jax.random.normal(kv, (C,)))
    return weight, bias, running_mean, running_var


if __name__ == "__main__":
    root = jax.random.PRNGKey(0)

    cases = [
        # shape               dtype          extra kwargs
        ((2, 4, 16, 16),      jnp.float32,   {}),                    # aligned HW
        ((2, 128, 7, 7),      jnp.float32,   {}),                    # lane-dense flat path
        ((2, 4, 7, 7),        jnp.float32,   {}),                    # fully unaligned fallback
        ((2, 32, 32, 32),     jnp.float32,   {"target_block_bytes": 64 * 1024}),  # multi-block grid
        ((2, 16, 16, 8),      jnp.bfloat16,  {}),                    # bf16 activations
    ]

    for idx, (shape, dtype, kwargs) in enumerate(cases):
        key = jax.random.fold_in(root, idx)
        kx, kp = jax.random.split(key)
        N, C, H, W = shape
        x = jax.random.normal(kx, shape, dtype=jnp.float32).astype(dtype)
        weight, bias, running_mean, running_var = _make_params(kp, C)

        out = frozen_batch_norm_2d(x, weight, bias, running_mean, running_var,
                                   use_pallas=True, **kwargs)
        out = jax.block_until_ready(out)
        ref = _reference(x, weight, bias, running_mean, running_var)

        assert out.shape == shape and out.dtype == dtype
        tol = 1e-5 if dtype == jnp.float32 else 2e-2
        assert jnp.allclose(out.astype(jnp.float32), ref.astype(jnp.float32),
                            atol=tol, rtol=tol), f"mismatch in case {idx}"

    # Auto-dispatch (tiny tensor -> fused XLA expression) stays correct too.
    key = jax.random.fold_in(root, 99)
    kx, kp = jax.random.split(key)
    x = jax.random.normal(kx, (2, 4, 16, 16), dtype=jnp.float32)
    weight, bias, running_mean, running_var = _make_params(kp, 4)
    out_auto = jax.block_until_ready(
        frozen_batch_norm_2d(x, weight, bias, running_mean, running_var))
    ref_auto = _reference(x, weight, bias, running_mean, running_var)
    assert jnp.allclose(out_auto, ref_auto, atol=1e-5, rtol=1e-5)

    print("KERNEL_OK")
</pallas_src>

<mosaic_0001>
module attributes {stable_mosaic.version = 11 : i64} {
  func.func @_frozen_bn_kernel(%arg0: i32, %arg1: i32, %arg2: memref<1x4x256xf32, #tpu.memory_space<vmem>>, %arg3: memref<4x1xf32, #tpu.memory_space<vmem>>, %arg4: memref<4x1xf32, #tpu.memory_space<vmem>>, %arg5: memref<1x4x256xf32, #tpu.memory_space<vmem>>) attributes {dimension_semantics = [#tpu.dimension_semantics<parallel>, #tpu.dimension_semantics<parallel>], iteration_bounds = array<i64: 2, 1>, scalar_prefetch = 0 : i64, scratch_operands = 0 : i64, tpu.core_type = #tpu.core_type<tc>, window_params = [{transform_indices = @transform_0, window_bounds = array<i64: 1, 4, 256>}, {pipeline_mode = #tpu.pipeline_mode<synchronous>, transform_indices = @transform_1, window_bounds = array<i64: 4, 1>}, {pipeline_mode = #tpu.pipeline_mode<synchronous>, transform_indices = @transform_2, window_bounds = array<i64: 4, 1>}, {transform_indices = @transform_3, window_bounds = array<i64: 1, 4, 256>}]} {
    %c0 = arith.constant 0 : index
    %c0_0 = arith.constant 0 : index
    %c0_1 = arith.constant 0 : index
    %0 = vector.load %arg2[%c0, %c0_0, %c0_1] : memref<1x4x256xf32, #tpu.memory_space<vmem>>, vector<1x4x256xf32>
    %1 = vector.shape_cast %0 : vector<1x4x256xf32> to vector<4x256xf32>
    %c0_2 = arith.constant 0 : index
    %c0_3 = arith.constant 0 : index
    %2 = vector.load %arg3[%c0_2, %c0_3] : memref<4x1xf32, #tpu.memory_space<vmem>>, vector<4x1xf32>
    %3 = vector.broadcast %2 : vector<4x1xf32> to vector<4x256xf32>
    %4 = arith.mulf %1, %3 : vector<4x256xf32>
    %c0_4 = arith.constant 0 : index
    %c0_5 = arith.constant 0 : index
    %5 = vector.load %arg4[%c0_4, %c0_5] : memref<4x1xf32, #tpu.memory_space<vmem>>, vector<4x1xf32>
    %6 = vector.broadcast %5 : vector<4x1xf32> to vector<4x256xf32>
    %7 = arith.addf %4, %6 : vector<4x256xf32>
    %c0_6 = arith.constant 0 : index
    %c0_7 = arith.constant 0 : index
    %c0_8 = arith.constant 0 : index
    %8 = vector.load %arg5[%c0_6, %c0_7, %c0_8] : memref<1x4x256xf32, #tpu.memory_space<vmem>>, vector<1x4x256xf32>
    %9 = vector.shape_cast %8 : vector<1x4x256xf32> to vector<4x256xf32>
    %10 = vector.shape_cast %7 : vector<4x256xf32> to vector<1x4x256xf32>
    tpu.vector_store %arg5[%c0_6, %c0_7, %c0_8], %10 {strides = array<i32>} : memref<1x4x256xf32, #tpu.memory_space<vmem>>, vector<1x4x256xf32>,
    return
  }
  func.func @transform_0(%arg0: i32, %arg1: i32) -> (i32, i32, i32) {
    %c0_i32 = arith.constant 0 : i32
    %c0_i32_0 = arith.constant 0 : i32
    return %arg0, %c0_i32, %arg1 : i32, i32, i32
  }
  func.func @transform_1(%arg0: i32, %arg1: i32) -> (i32, i32) {
    %c0_i32 = arith.constant 0 : i32
    %c0_i32_0 = arith.constant 0 : i32
    %c0_i32_1 = arith.constant 0 : i32
    return %c0_i32, %c0_i32_0 : i32, i32
  }
  func.func @transform_2(%arg0: i32, %arg1: i32) -> (i32, i32) {
    %c0_i32 = arith.constant 0 : i32
    %c0_i32_0 = arith.constant 0 : i32
    %c0_i32_1 = arith.constant 0 : i32
    return %c0_i32, %c0_i32_0 : i32, i32
  }
  func.func @transform_3(%arg0: i32, %arg1: i32) -> (i32, i32, i32) {
    %c0_i32 = arith.constant 0 : i32
    %c0_i32_0 = arith.constant 0 : i32
    return %arg0, %c0_i32, %arg1 : i32, i32, i32
  }
}

</mosaic_0001>

<llo_original>
// kernel: tpu_custom_call.1
$region0: #{tpu_custom_call.1}
  #allocation0 [shape = 'u32[]', space=smem, size = 0x4, offset = 0x4, fixed_abs, tag = 'smem constant byte address 0x4 - core index']
  #allocation1 [shape = 'u32[144,128]{1,0:T(1,128)}', space=vmem, size = 0x12000, scoped, tag = 'internal scratch']
  %s0 = inlined_call_operand.hbm [shape: f32[2,4,256], index: 0, kind: input, shape index: {}]
  %s1 = inlined_call_operand.vmem [shape: f32[4,1], index: 1, kind: input, shape index: {}]
  %s2 = inlined_call_operand.vmem [shape: f32[4,1], index: 2, kind: input, shape index: {}]
  %s3 = inlined_call_operand.hbm [shape: f32[2,4,256], index: 3, kind: output, shape index: {}]
  %s4 = sld [smem:[#allocation0]]
  $region49: #{tpu_custom_call.1} parent=0
    _
  %s6 = ssub.s32 1, %s4
  %s7 = scalar_select 0, %s6, %s4
  $region1: #{tpu_custom_call.1} parent=0
    #allocation2 [shape = 'u8[8192]{0}', space=vmem, size = 0x2000, scoped, tag = 'input window, operand 0']
    #allocation3 [shape = 's32[2]{0}', space=sflag, size = 0x8, scoped, tag = 'scoped memory for tpu_custom_call.1']
    #allocation4 [shape = 's32[2]{0}', space=sflag, size = 0x8, scoped, tag = 'scoped memory for tpu_custom_call.1']
    #allocation5 [shape = 'u8[8192]{0}', space=vmem, size = 0x2000, scoped, tag = 'output window, operand 0']
    %8 = vsyncpa [#allocation3], 0
    %s9 = scalar_lea.sflag [#allocation3], 1
    %10 = vsyncpa %s9, 0
    %11 = vsyncpa [#allocation4], 0
    %s12 = scalar_lea.sflag [#allocation4], 1
    %13 = vsyncpa %s12, 0
    loop: start=0, step=1, limit=4
    $region2: #{tpu_custom_call.1} parent=1 // loop_pre_header
      _
    $region3: #{tpu_custom_call.1} parent=1 // loop_header
      %s15 = sphi 0, %s19
      %p16 = scmp.ge.s32.totalorder %s15, 4
      %s22 = sphi 0, %s34
      %s23 = sphi 0, %s30
      %s24 = sphi 0, %s22
      %s25 = sphi 0, %s23
      %s26 = sphi 0, %s24
      %s27 = sphi 0, %s25
      %s39 = sphi 0, %s41
      %s42 = sphi 0, %s39
      %s43 = sphi 0, %s42
      %s59 = sphi 0, %s43
      %s63 = sphi 0, %s63
      %s65 = sphi 0, %s63
      %s66 = sphi 0, %s65
      %s80 = sphi 0, %s66
      %s84 = sphi 0, %s84
      %s86 = sphi 0, %s84
      %s87 = sphi 0, %s86
      %s101 = sphi 0, %s87
      %s109 = sphi 0, %s111
      %s112 = sphi 0, %s109
      %s113 = sphi 0, %s112
      %s129 = sphi 0, %s113
    $region4: #{tpu_custom_call.1} parent=1 // loop_header_branch
      %18 = sbr.rel (%p16) target = $region8
    $region5: #{tpu_custom_call.1} parent=1 // loop_body
      %s20 = ssub.s32 %s15, 1
      %s21 = ssub.s32 %s15, 2
      %s28 = sadd.s32 1, %s23
      %p29 = scmp.ge.s32.totalorder %s28, 1
      %s30 = scalar_select %p29, 0, %s28
      %s31 = sadd.s32 1, %s22
      %s32 = scalar_select %p29, %s31, %s22
      %p33 = scmp.ge.s32.totalorder %s32, 2
      %s34 = scalar_select %p33, 0, %s32
      %s35 = ssub.s32 %s22, %s34
      %s36 = ssub.s32 %s23, %s30
      %s37 = sor.u32 %s35, %s36
      %p38 = scmp.eq.s32.totalorder %s37, 0
      %s40 = sadd.s32 %s39, 1
      %s41 = scalar_select %p38, %s39, %s40
      %p44 = pneg %p38
      %p45 = scmp.eq.s32.totalorder %s15, 1
      %p46 = por %p44, %p45
      %p47 = scmp.ne.s32.totalorder %s39, %s42
      %p48 = scmp.eq.s32.totalorder %s15, 0
      %p49 = por %p47, %p48
      %p50 = scmp.ne.s32.totalorder %s39, %s42
      %p51 = scmp.eq.s32.totalorder %s20, 1
      %p52 = por %p50, %p51
      %p53 = scmp.ne.s32.totalorder %s42, %s43
      %p54 = scmp.eq.s32.totalorder %s20, 0
      %p55 = por %p53, %p54
      %p56 = scmp.ne.s32.totalorder %s42, %s43
      %p57 = scmp.eq.s32.totalorder %s21, 1
      %p58 = por %p56, %p57
      %p60 = scmp.ne.s32.totalorder %s43, %s59
      %p61 = scmp.eq.s32.totalorder %s21, 0
      %p62 = por %p60, %p61
      %s64 = sadd.s32 %s63, 1
      %p67 = scmp.eq.s32.totalorder %s15, 1
      %p68 = scmp.ne.s32.totalorder %s63, %s65
      %p69 = scmp.eq.s32.totalorder %s15, 0
      %p70 = por %p68, %p69
      %p71 = scmp.ne.s32.totalorder %s63, %s65
      %p72 = scmp.eq.s32.totalorder %s20, 1
      %p73 = por %p71, %p72
      %p74 = scmp.ne.s32.totalorder %s65, %s66
      %p75 = scmp.eq.s32.totalorder %s20, 0
      %p76 = por %p74, %p75
      %p77 = scmp.ne.s32.totalorder %s65, %s66
      %p78 = scmp.eq.s32.totalorder %s21, 1
      %p79 = por %p77, %p78
      %p81 = scmp.ne.s32.totalorder %s66, %s80
      %p82 = scmp.eq.s32.totalorder %s21, 0
      %p83 = por %p81, %p82
      %s85 = sadd.s32 %s84, 1
      %p88 = scmp.eq.s32.totalorder %s15, 1
      %p89 = scmp.ne.s32.totalorder %s84, %s86
      %p90 = scmp.eq.s32.totalorder %s15, 0
      %p91 = por %p89, %p90
      %p92 = scmp.ne.s32.totalorder %s84, %s86
      %p93 = scmp.eq.s32.totalorder %s20, 1
      %p94 = por %p92, %p93
      %p95 = scmp.ne.s32.totalorder %s86, %s87
      %p96 = scmp.eq.s32.totalorder %s20, 0
      %p97 = por %p95, %p96
      %p98 = scmp.ne.s32.totalorder %s86, %s87
      %p99 = scmp.eq.s32.totalorder %s21, 1
      %p100 = por %p98, %p99
      %p102 = scmp.ne.s32.totalorder %s87, %s101
      %p103 = scmp.eq.s32.totalorder %s21, 0
      %p104 = por %p102, %p103
      %s105 = ssub.s32 %s22, %s34
      %s106 = ssub.s32 %s23, %s30
      %s107 = sor.u32 %s105, %s106
      %p108 = scmp.eq.s32.totalorder %s107, 0
      %s110 = sadd.s32 %s109, 1
      %s111 = scalar_select %p108, %s109, %s110
      %p114 = pneg %p108
      %p115 = scmp.eq.s32.totalorder %s15, 1
      %p116 = por %p114, %p115
      %p117 = scmp.ne.s32.totalorder %s109, %s112
      %p118 = scmp.eq.s32.totalorder %s15, 0
      %p119 = por %p117, %p118
      %p120 = scmp.ne.s32.totalorder %s109, %s112
      %p121 = scmp.eq.s32.totalorder %s20, 1
      %p122 = por %p120, %p121
      %p123 = scmp.ne.s32.totalorder %s112, %s113
      %p124 = scmp.eq.s32.totalorder %s20, 0
      %p125 = por %p123, %p124
      %p126 = scmp.ne.s32.totalorder %s112, %s113
      %p127 = scmp.eq.s32.totalorder %s21, 1
      %p128 = por %p126, %p127
      %p130 = scmp.ne.s32.totalorder %s113, %s129
      %p131 = scmp.eq.s32.totalorder %s21, 0
      %p132 = por %p130, %p131
      %p133 = scmp.le.s32.totalorder 1, %s15
      %p134 = scmp.lt.s32.totalorder %s15, 3
      %p135 = pnand %p133, %p134
      %p136 = pneg %p135
      // Predicated region
      $region9: #{tpu_custom_call.1} parent=5 // pred_check
        _
      $region10: #{tpu_custom_call.1} parent=5 // pred_check_branch
        %138 = sbr.rel (%p135) target = $region12
      $region11: #{tpu_custom_call.1} parent=5 // pred_region
        %s139 = ssub.s32 %s15, 1
        // Predicated region
        $region13: #{tpu_custom_call.1} parent=11 // pred_check
          %p140 = pneg %p76
        $region14: #{tpu_custom_call.1} parent=11 // pred_check_branch
          %142 = sbr.rel (%p140) target = $region16
        $region15: #{tpu_custom_call.1} parent=11 // pred_region
          _
        $region16: #{tpu_custom_call.1} parent=11 // pred_fallthru
          _
        // Predicated region
        $region17: #{tpu_custom_call.1} parent=11 // pred_check
          %p143 = pneg %p97
        $region18: #{tpu_custom_call.1} parent=11 // pred_check_branch
          %145 = sbr.rel (%p143) target = $region20
        $region19: #{tpu_custom_call.1} parent=11 // pred_region
          _
        $region20: #{tpu_custom_call.1} parent=11 // pred_fallthru
          _
      $region12: #{tpu_custom_call.1} parent=5 // pred_fallthru
        _
      %p146 = scmp.lt.s32.totalorder %s15, 2
      // Predicated region
      $region21: #{tpu_custom_call.1} parent=5 // pred_check
        %p147 = pneg %p146
      $region22: #{tpu_custom_call.1} parent=5 // pred_check_branch
        %149 = sbr.rel (%p147) target = $region24
      $region23: #{tpu_custom_call.1} parent=5 // pred_region
        // Predicated region
        $region25: #{tpu_custom_call.1} parent=23 // pred_check
          %p150 = pneg %p49
        $region26: #{tpu_custom_call.1} parent=23 // pred_check_branch
          %152 = sbr.rel (%p150) target = $region28
        $region27: #{tpu_custom_call.1} parent=23 // pred_region
          %s153 = sand.u32 %s39, 1
          %s154 = scalar_lea.sflag [#allocation3], %s153
          %s155 = sand.u32 %s39, 1
          %s156 = smul.addr %s155, 8
          %s157 = scalar_lea.vmem [#allocation2], %s156
          %s158 = smul.u32 2, %s23
          %s160 = ssub.s32 128, 128
          %161 = vsyncadd %s154, %s160
          %s162 = smul.addr %s22, 2
          %s163 = sadd.s32 %s158, %s162
          %s164 = smul.addr %s163, 64
          %s165 = scalar_lea.hbm %s0, %s164
          %s167 = sshll.u32 %s157, 4
          %s168 = int_to_ptr.vmem [resolvable:$true] %s167
          %170 = dma.hbm_to_vmem [thread:$0]  %s165, 128, %s168, %s154
        $region28: #{tpu_custom_call.1} parent=23 // pred_fallthru
          _
      $region24: #{tpu_custom_call.1} parent=5 // pred_fallthru
        _
      %p171 = scmp.le.s32.totalorder 1, %s15
      %p172 = scmp.lt.s32.totalorder %s15, 3
      %p173 = pnand %p171, %p172
      %p174 = pneg %p173
      // Predicated region
      $region29: #{tpu_custom_call.1} parent=5 // pred_check
        _
      $region30: #{tpu_custom_call.1} parent=5 // pred_check_branch
        %176 = sbr.rel (%p173) target = $region32
      $region31: #{tpu_custom_call.1} parent=5 // pred_region
        %s177 = ssub.s32 %s15, 1
        %s178 = sand.u32 %s42, 1
        %s179 = scalar_lea.sflag [#allocation3], %s178
        %s180 = sand.u32 %s42, 1
        %s181 = smul.addr %s180, 8
        %s182 = scalar_lea.vmem [#allocation2], %s181
        // Predicated region
        $region33: #{tpu_custom_call.1} parent=31 // pred_check
          %p183 = pneg %p55
        $region34: #{tpu_custom_call.1} parent=31 // pred_check_branch
          %185 = sbr.rel (%p183) target = $region36
        $region35: #{tpu_custom_call.1} parent=31 // pred_region
          %186 = dma.done %s179, 128
        $region36: #{tpu_custom_call.1} parent=31 // pred_fallthru
          _
        %s187 = sand.u32 %s42, 1
        %s188 = scalar_lea.sflag [#allocation3], %s187
        %s189 = sand.u32 %s42, 1
        %s190 = smul.addr %s189, 8
        %s191 = scalar_lea.vmem [#allocation2], %s190
        %p192 = pneg %p55
        %p193 = pneg %p52
        %p194 = pneg %p76
        %p195 = pneg %p73
        %p196 = pneg %p97
        %p197 = pneg %p94
        %p198 = pneg %p125
        %p199 = pneg %p122
        %s200 = sand.u32 %s112, 1
        %s201 = scalar_lea.sflag [#allocation4], %s200
        %s202 = sand.u32 %s112, 1
        %s203 = smul.addr %s202, 8
        %s204 = scalar_lea.vmem [#allocation5], %s203
        %s205 = smul.u32 2, %s25
        %s206 = smul.u32 2, %s25
        %v207 = vld [vmem:[%s182] sm:$0xff]
        %v208 = vld [vmem:[%s1] sm:$0xf]
        %210 = vset.pattern.permute.xlu0 0
        %211 = vperm.xlu0 %210, %v208
        %v212 = vpop.permute.xlu0 %211
        %v214 = vunpack.c.l.s4 839922192
        %v215 = vunpack.c.0.s8 %v214
        %v216 = vlaneseq
        %v217 = vshrl.u32 %v216, 7
        %v218 = vsub.s32 %v215, %v217
        %v219 = vrot.slane %v212, %v218
        %v221 = vmul.f32 %v207, %v219
        %v222 = vld [vmem:[%s2] sm:$0xf]
        %224 = vset.pattern.permute.xlu0 0
        %225 = vperm.xlu0 %224, %v222
        %v226 = vpop.permute.xlu0 %225
        %v228 = vunpack.c.l.s4 839922192
        %v229 = vunpack.c.0.s8 %v228
        %v230 = vlaneseq
        %v231 = vshrl.u32 %v230, 7
        %v232 = vsub.s32 %v229, %v231
        %v233 = vrot.slane %v226, %v232
        %v235 = vadd.f32 %v221, %v233
        %236 = vst [vmem:[%s204] sm:$0xff] %v235
        %s237 = sand.u32 %s112, 1
        %s238 = scalar_lea.sflag [#allocation4], %s237
        %s239 = sand.u32 %s112, 1
        %s240 = smul.addr %s239, 8
        %s241 = scalar_lea.vmem [#allocation5], %s240
        // Predicated region
        $region37: #{tpu_custom_call.1} parent=31 // pred_check
          %p242 = pneg %p122
        $region38: #{tpu_custom_call.1} parent=31 // pred_check_branch
          %244 = sbr.rel (%p242) target = $region40
        $region39: #{tpu_custom_call.1} parent=31 // pred_region
          %s245 = smul.u32 2, %s25
          %s247 = ssub.s32 128, 128
          %248 = vsyncadd %s238, %s247
          %s249 = smul.addr %s24, 2
          %s250 = sadd.s32 %s245, %s249
          %s251 = smul.addr %s250, 64
          %s252 = scalar_lea.hbm %s3, %s251
          %s254 = sshll.u32 %s241, 4
          %s255 = int_to_ptr.vmem [resolvable:$true] %s254
          %257 = dma.vmem_to_hbm [thread:$0]  %s255, 128, %s252, %s238
        $region40: #{tpu_custom_call.1} parent=31 // pred_fallthru
          _
      $region32: #{tpu_custom_call.1} parent=5 // pred_fallthru
        _
      %p258 = scmp.le.s32.totalorder 2, %s15
      // Predicated region
      $region41: #{tpu_custom_call.1} parent=5 // pred_check
        %p259 = pneg %p258
      $region42: #{tpu_custom_call.1} parent=5 // pred_check_branch
        %261 = sbr.rel (%p259) target = $region44
      $region43: #{tpu_custom_call.1} parent=5 // pred_region
        %s262 = ssub.s32 %s15, 2
        // Predicated region
        $region45: #{tpu_custom_call.1} parent=43 // pred_check
          %p263 = pneg %p128
        $region46: #{tpu_custom_call.1} parent=43 // pred_check_branch
          %265 = sbr.rel (%p263) target = $region48
        $region47: #{tpu_custom_call.1} parent=43 // pred_region
          %s266 = sand.u32 %s113, 1
          %s267 = scalar_lea.sflag [#allocation4], %s266
          %s268 = sand.u32 %s113, 1
          %s269 = smul.addr %s268, 8
          %s270 = scalar_lea.vmem [#allocation5], %s269
          %271 = dma.done %s267, 128
        $region48: #{tpu_custom_call.1} parent=43 // pred_fallthru
          _
      $region44: #{tpu_custom_call.1} parent=5 // pred_fallthru
        _
    $region6: #{tpu_custom_call.1} parent=1 // loop_footer
      %s19 = sadd.s32 1, %s15
    $region7: #{tpu_custom_call.1} parent=1 // loop_footer_branch
      %14 = sbr.rel target = $region3
    $region8: #{tpu_custom_call.1} parent=1 // loop_exit
      _
    %272 = vsyncpa [#allocation3], 1
    %s273 = scalar_lea.sflag [#allocation3], 1
    %274 = vsyncpa %s273, 1
    %275 = vsyncpa [#allocation4], 1
    %s276 = scalar_lea.sflag [#allocation4], 1
    %277 = vsyncpa %s276, 1

</llo_original>
